<compile_context>
chip_gen: v5e
topology: v5e:2x2
jax: 0.10.0
libtpu: 0.0.40
codegen_flags: <defaults>
</compile_context>

<pallas_src>
import math

import jax
import jax.numpy as jnp
from jax.experimental import pallas as pl
from jax.experimental.pallas import tpu as pltpu


def _patch_embed_kernel(x_ref, w_ref, b_ref, o_ref):
    # x_ref: (tm, K) bf16, w_ref: (K, Np) bf16, b_ref: (1, Np) f32,
    # o_ref: (tm, Np) f32.  bf16 MXU matmul with f32 accumulation.
    acc = jnp.dot(x_ref[...], w_ref[...], preferred_element_type=jnp.float32)
    o_ref[...] = (acc + b_ref[...]).astype(o_ref.dtype)


def patch_embed_matmul(patches, weight_kn, bias2d, *, tm=256):
    """patches: (M, K) bf16, weight_kn: (K, Np) bf16, bias2d: (1, Np) f32.

    Np must be a multiple of 128 (lane-dense output). Returns (M, Np) f32.
    """
    M, K = patches.shape
    Kw, Np = weight_kn.shape
    assert Kw == K and Np % 128 == 0

    # Big M tile (MXU row utilization, fewer ~0.35us grid steps)...
    tm = min(tm, M)
    # ...but if that leaves a single grid step and M is comfortably splittable,
    # halve the tile so v7x's two TensorCores both get a block (free on 1-TC
    # chips).  Keep tm a multiple of 32 so bf16 sublane packing stays aligned.
    if pl.cdiv(M, tm) == 1 and M >= 64 and M % 32 == 0:
        tm = M // 2

    grid = (pl.cdiv(M, tm),)

    cost = pl.CostEstimate(
        flops=2 * M * K * Np,
        transcendentals=0,
        bytes_accessed=(M * K * patches.dtype.itemsize
                        + K * Np * weight_kn.dtype.itemsize
                        + Np * 4
                        + M * Np * 4),
    )

    # NOTE: the (K, Np) weight and (1, Np) bias blocks are grid-invariant;
    # Pallas only re-fetches on block-index change, so no per-step DMA cost.
    # TODO(synk): at ViT-scale dims consider pipeline_mode buffering tweaks to
    # shave the weight's second VMEM buffer on v7x's 64 MiB.
    return pl.pallas_call(
        _patch_embed_kernel,
        out_shape=jax.ShapeDtypeStruct((M, Np), jnp.float32),
        grid_spec=pltpu.PrefetchScalarGridSpec(
            num_scalar_prefetch=0,
            grid=grid,
            in_specs=[
                pl.BlockSpec((tm, K), lambda i: (i, 0)),
                pl.BlockSpec((K, Np), lambda i: (0, 0)),
                pl.BlockSpec((1, Np), lambda i: (0, 0)),
            ],
            out_specs=pl.BlockSpec((tm, Np), lambda i: (i, 0)),
        ),
        compiler_params=pltpu.CompilerParams(
            dimension_semantics=("parallel",),
            vmem_limit_bytes=48 * 1024 * 1024,
            # Allow the patchify transpose/reshape/bf16-cast producer to fuse
            # into the pallas_call input DMA instead of a separate HBM pass.
            allow_input_fusion=[True, False, False],
        ),
        cost_estimate=cost,
    )(patches, weight_kn, bias2d)


def vit_patch_embed_forward(x, weight, bias, patch_size,
                            *, compute_dtype=jnp.bfloat16):
    """x: (B, C, H, W); weight: (dim, C, ph, pw); bias: (dim,).

    Returns (B, H//ph, W//pw, dim) float32 -- matches torch 'b h w c' output.
    """
    B, C, H, W = x.shape
    dim = weight.shape[0]
    ph, pw = patch_size
    assert H % ph == 0 and W % pw == 0
    gh, gw = H // ph, W // pw
    K = C * ph * pw
    Np = ((dim + 127) // 128) * 128  # lane-pad output width to multiple of 128

    # Patchify: extract non-overlapping patches, flatten each in (c, i, j)
    # order -- exactly Conv2d's reduction order.  Cast to bf16 first so the
    # (possibly fused) transpose moves half the bytes.
    xc = x.astype(compute_dtype)
    xp = xc.reshape(B, C, gh, ph, gw, pw)
    xp = jnp.transpose(xp, (0, 2, 4, 1, 3, 5))            # (B, gh, gw, C, ph, pw)
    patches = xp.reshape(B * gh * gw, K)                   # (M, K) bf16

    w_kn = weight.reshape(dim, K).T.astype(compute_dtype)  # (K, dim) bf16
    w_kn = jnp.pad(w_kn, ((0, 0), (0, Np - dim)))          # (K, Np)
    b2d = jnp.pad(bias, (0, Np - dim)).reshape(1, Np).astype(jnp.float32)

    out = patch_embed_matmul(patches, w_kn, b2d)           # (M, Np) f32
    out = out[:, :dim]                                     # drop lane padding
    return out.reshape(B, gh, gw, dim)


def init_params(key, dim, num_channels, patch_size):
    """Deterministic xavier_uniform on weight viewed as (dim, -1); zero bias."""
    ph, pw = patch_size
    fan_in = num_channels * ph * pw
    fan_out = dim
    bound = math.sqrt(6.0 / (fan_in + fan_out))
    w = jax.random.uniform(
        key, (dim, num_channels, ph, pw), dtype=jnp.float32,
        minval=-bound, maxval=bound)
    b = jnp.zeros((dim,), dtype=jnp.float32)
    return w, b


if __name__ == "__main__":
    # Module config: dim=32, num_channels=4, resolution=(16,16), patch_size=8
    dim = 32
    num_channels = 4
    resolution = (16, 16)
    patch_size = (8, 8)

    key = jax.random.PRNGKey(0)
    k_x, k_w = jax.random.split(key)

    B = 2
    x = jax.random.normal(k_x, (B, num_channels, *resolution), dtype=jnp.float32)
    weight, bias = init_params(k_w, dim, num_channels, patch_size)

    gh = resolution[0] // patch_size[0]
    gw = resolution[1] // patch_size[1]

    fwd = jax.jit(lambda xx: vit_patch_embed_forward(xx, weight, bias, patch_size))
    out = jax.block_until_ready(fwd(x))

    # Sanity-check against plain-JAX references (lax conv + transpose).
    def ref_conv(xf, wf):
        r = jax.lax.conv_general_dilated(
            xf, wf, window_strides=patch_size, padding="VALID",
            dimension_numbers=("NCHW", "OIHW", "NCHW"),
            precision=jax.lax.Precision.HIGHEST)
        return jnp.transpose(r + bias.reshape(1, dim, 1, 1), (0, 2, 3, 1))

    # Tight check: same bf16-quantized inputs, f32 accumulation (kernel vs XLA).
    ref_q = ref_conv(x.astype(jnp.bfloat16).astype(jnp.float32),
                     weight.astype(jnp.bfloat16).astype(jnp.float32))
    # Loose check: full-f32 reference (kernel inputs are bf16-quantized).
    ref_f = ref_conv(x, weight)

    assert out.shape == (B, gh, gw, dim)
    assert jnp.allclose(out, ref_q, atol=1e-3, rtol=1e-3)
    assert jnp.allclose(out, ref_f, atol=3e-2, rtol=3e-2)

    print("KERNEL_OK")
</pallas_src>

<mosaic_0001>
module attributes {stable_mosaic.version = 11 : i64} {
  func.func @_patch_embed_kernel(%arg0: i32, %arg1: memref<8x256xbf16, #tpu.memory_space<vmem>>, %arg2: memref<256x128xbf16, #tpu.memory_space<vmem>>, %arg3: memref<1x128xf32, #tpu.memory_space<vmem>>, %arg4: memref<8x128xf32, #tpu.memory_space<vmem>>) attributes {dimension_semantics = [#tpu.dimension_semantics<parallel>], iteration_bounds = array<i64: 1>, scalar_prefetch = 0 : i64, scratch_operands = 0 : i64, tpu.core_type = #tpu.core_type<tc>, window_params = [{transform_indices = @transform_0, window_bounds = array<i64: 8, 256>}, {pipeline_mode = #tpu.pipeline_mode<synchronous>, transform_indices = @transform_1, window_bounds = array<i64: 256, 128>}, {pipeline_mode = #tpu.pipeline_mode<synchronous>, transform_indices = @transform_2, window_bounds = array<i64: 1, 128>}, {transform_indices = @transform_3, window_bounds = array<i64: 8, 128>}]} {
    %c0 = arith.constant 0 : index
    %c0_0 = arith.constant 0 : index
    %0 = vector.load %arg1[%c0, %c0_0] : memref<8x256xbf16, #tpu.memory_space<vmem>>, vector<8x256xbf16>
    %c0_1 = arith.constant 0 : index
    %c0_2 = arith.constant 0 : index
    %1 = vector.load %arg2[%c0_1, %c0_2] : memref<256x128xbf16, #tpu.memory_space<vmem>>, vector<256x128xbf16>
    %cst = arith.constant dense<0.000000e+00> : vector<8x128xf32>
    %2 = tpu.matmul %0, %1, %cst {dimension_numbers = #tpu.dot_dimension_numbers<[1], [0], [0], [1], [0, 0, 1, 1], [], []>} : vector<8x256xbf16>, vector<256x128xbf16>, vector<8x128xf32> -> vector<8x128xf32>
    %c0_3 = arith.constant 0 : index
    %c0_4 = arith.constant 0 : index
    %3 = vector.load %arg3[%c0_3, %c0_4] : memref<1x128xf32, #tpu.memory_space<vmem>>, vector<1x128xf32>
    %4 = vector.broadcast %3 : vector<1x128xf32> to vector<8x128xf32>
    %5 = arith.addf %2, %4 : vector<8x128xf32>
    %c0_5 = arith.constant 0 : index
    %c0_6 = arith.constant 0 : index
    %6 = vector.load %arg4[%c0_5, %c0_6] : memref<8x128xf32, #tpu.memory_space<vmem>>, vector<8x128xf32>
    tpu.vector_store %arg4[%c0_5, %c0_6], %5 {strides = array<i32>} : memref<8x128xf32, #tpu.memory_space<vmem>>, vector<8x128xf32>,
    return
  }
  func.func @transform_0(%arg0: i32) -> (i32, i32) {
    %c0_i32 = arith.constant 0 : i32
    %c0_i32_0 = arith.constant 0 : i32
    return %arg0, %c0_i32 : i32, i32
  }
  func.func @transform_1(%arg0: i32) -> (i32, i32) {
    %c0_i32 = arith.constant 0 : i32
    %c0_i32_0 = arith.constant 0 : i32
    %c0_i32_1 = arith.constant 0 : i32
    return %c0_i32, %c0_i32_0 : i32, i32
  }
  func.func @transform_2(%arg0: i32) -> (i32, i32) {
    %c0_i32 = arith.constant 0 : i32
    %c0_i32_0 = arith.constant 0 : i32
    %c0_i32_1 = arith.constant 0 : i32
    return %c0_i32, %c0_i32_0 : i32, i32
  }
  func.func @transform_3(%arg0: i32) -> (i32, i32) {
    %c0_i32 = arith.constant 0 : i32
    %c0_i32_0 = arith.constant 0 : i32
    return %arg0, %c0_i32 : i32, i32
  }
}

</mosaic_0001>

<llo_original>
// kernel: _lambda_.1
$region0: #{_lambda_.1}
  #allocation0 [shape = 'u32[]', space=smem, size = 0x4, offset = 0x4, fixed_abs, tag = 'smem constant byte address 0x4 - core index']
  #allocation1 [shape = 'u32[72,128]{1,0:T(1,128)}', space=vmem, size = 0x9000, scoped, tag = 'internal scratch']
  %s0 = inlined_call_operand.vmem [shape: bf16[8,256], index: 0, kind: input, shape index: {}]
  %s1 = inlined_call_operand.vmem [shape: bf16[256,128], index: 1, kind: input, shape index: {}]
  %s2 = inlined_call_operand.vmem [shape: f32[1,128], index: 2, kind: input, shape index: {}]
  %s3 = inlined_call_operand.hbm [shape: f32[8,128], index: 3, kind: output, shape index: {}]
  %s4 = sld [smem:[#allocation0]]
  $region22: #{_lambda_.1} parent=0
    _
  %s6 = ssub.s32 1, %s4
  %s7 = scalar_select 0, %s6, %s4
  $region1: #{_lambda_.1} parent=0
    #allocation2 [shape = 'u8[4096]{0}', space=vmem, size = 0x1000, scoped, tag = 'output window, operand 0, single buffered']
    #allocation3 [shape = 's32[1]{0}', space=sflag, size = 0x4, scoped, tag = 'scoped memory for _lambda_.1']
    %8 = vsyncpa [#allocation3], 0
    // Predicated region
    $region2: #{_lambda_.1} parent=1 // pred_check
      _
    $region3: #{_lambda_.1} parent=1 // pred_check_branch
      %10 = sbr.rel (0) target = $region5
    $region4: #{_lambda_.1} parent=1 // pred_region
      _
    $region5: #{_lambda_.1} parent=1 // pred_fallthru
      _
    // Predicated region
    $region6: #{_lambda_.1} parent=1 // pred_check
      _
    $region7: #{_lambda_.1} parent=1 // pred_check_branch
      %12 = sbr.rel (0) target = $region9
    $region8: #{_lambda_.1} parent=1 // pred_region
      _
    $region9: #{_lambda_.1} parent=1 // pred_fallthru
      _
    // Predicated region
    $region10: #{_lambda_.1} parent=1 // pred_check
      _
    $region11: #{_lambda_.1} parent=1 // pred_check_branch
      %14 = sbr.rel (0) target = $region13
    $region12: #{_lambda_.1} parent=1 // pred_region
      _
    $region13: #{_lambda_.1} parent=1 // pred_fallthru
      _
    %v15 = vld [vmem:[%s0] sm:$0xff]
    %v16 = vld [vmem:[%s1] sm:$0xf]
    %v17 = vld [vmem:[%s1 + $0x4] sm:$0xf]
    %v18 = vld [vmem:[%s1 + $0x8] sm:$0xf]
    %v19 = vld [vmem:[%s1 + $0xc] sm:$0xf]
    %v20 = vld [vmem:[%s1 + $0x10] sm:$0xf]
    %v21 = vld [vmem:[%s1 + $0x14] sm:$0xf]
    %v22 = vld [vmem:[%s1 + $0x18] sm:$0xf]
    %v23 = vld [vmem:[%s1 + $0x1c] sm:$0xf]
    %v24 = vld [vmem:[%s1 + $0x20] sm:$0xf]
    %v25 = vld [vmem:[%s1 + $0x24] sm:$0xf]
    %v26 = vld [vmem:[%s1 + $0x28] sm:$0xf]
    %v27 = vld [vmem:[%s1 + $0x2c] sm:$0xf]
    %v28 = vld [vmem:[%s1 + $0x30] sm:$0xf]
    %v29 = vld [vmem:[%s1 + $0x34] sm:$0xf]
    %v30 = vld [vmem:[%s1 + $0x38] sm:$0xf]
    %v31 = vld [vmem:[%s1 + $0x3c] sm:$0xf]
    %v32 = vld [vmem:[%s1 + $0x40] sm:$0xf]
    %v33 = vld [vmem:[%s1 + $0x44] sm:$0xf]
    %v34 = vld [vmem:[%s1 + $0x48] sm:$0xf]
    %v35 = vld [vmem:[%s1 + $0x4c] sm:$0xf]
    %v36 = vld [vmem:[%s1 + $0x50] sm:$0xf]
    %v37 = vld [vmem:[%s1 + $0x54] sm:$0xf]
    %v38 = vld [vmem:[%s1 + $0x58] sm:$0xf]
    %v39 = vld [vmem:[%s1 + $0x5c] sm:$0xf]
    %v40 = vld [vmem:[%s1 + $0x60] sm:$0xf]
    %v41 = vld [vmem:[%s1 + $0x64] sm:$0xf]
    %v42 = vld [vmem:[%s1 + $0x68] sm:$0xf]
    %v43 = vld [vmem:[%s1 + $0x6c] sm:$0xf]
    %v44 = vld [vmem:[%s1 + $0x70] sm:$0xf]
    %v45 = vld [vmem:[%s1 + $0x74] sm:$0xf]
    %v46 = vld [vmem:[%s1 + $0x78] sm:$0xf]
    %v47 = vld [vmem:[%s1 + $0x7c] sm:$0xf]
    %v48 = vld [vmem:[%s2] sm:$0x1]
    %v50 = vperm.slane %v48, 0
    %v53 = vunpack.c.l.b16 %v15
    %v54 = vunpack.c.h.b16 %v15
    %v55 = vpack.c.b16 %v53, %v53
    %v56 = vpack.c.b16 %v54, %v54
    %v91 = vunpack.c.l.b16 %v16
    %v92 = vunpack.c.l.b16 %v17
    %v93 = vunpack.c.l.b16 %v18
    %v94 = vunpack.c.l.b16 %v19
    %v95 = vunpack.c.l.b16 %v20
    %v96 = vunpack.c.l.b16 %v21
    %v97 = vunpack.c.l.b16 %v22
    %v98 = vunpack.c.l.b16 %v23
    %v99 = vunpack.c.l.b16 %v24
    %v100 = vunpack.c.l.b16 %v25
    %v101 = vunpack.c.l.b16 %v26
    %v102 = vunpack.c.l.b16 %v27
    %v103 = vunpack.c.l.b16 %v28
    %v104 = vunpack.c.l.b16 %v29
    %v105 = vunpack.c.l.b16 %v30
    %v106 = vunpack.c.l.b16 %v31
    %v107 = vunpack.c.l.b16 %v32
    %v108 = vunpack.c.l.b16 %v33
    %v109 = vunpack.c.l.b16 %v34
    %v110 = vunpack.c.l.b16 %v35
    %v111 = vunpack.c.l.b16 %v36
    %v112 = vunpack.c.l.b16 %v37
    %v113 = vunpack.c.l.b16 %v38
    %v114 = vunpack.c.l.b16 %v39
    %v115 = vunpack.c.l.b16 %v40
    %v116 = vunpack.c.l.b16 %v41
    %v117 = vunpack.c.l.b16 %v42
    %v118 = vunpack.c.l.b16 %v43
    %v119 = vunpack.c.l.b16 %v44
    %v120 = vunpack.c.l.b16 %v45
    %v121 = vunpack.c.l.b16 %v46
    %v122 = vunpack.c.l.b16 %v47
    %v123 = vpack.c.b16 %v92, %v91
    %v124 = vpack.c.b16 %v94, %v93
    %v125 = vpack.c.b16 %v96, %v95
    %v126 = vpack.c.b16 %v98, %v97
    %v127 = vpack.c.b16 %v100, %v99
    %v128 = vpack.c.b16 %v102, %v101
    %v129 = vpack.c.b16 %v104, %v103
    %v130 = vpack.c.b16 %v106, %v105
    %v131 = vpack.c.b16 %v108, %v107
    %v132 = vpack.c.b16 %v110, %v109
    %v133 = vpack.c.b16 %v112, %v111
    %v134 = vpack.c.b16 %v114, %v113
    %v135 = vpack.c.b16 %v116, %v115
    %v136 = vpack.c.b16 %v118, %v117
    %v137 = vpack.c.b16 %v120, %v119
    %v138 = vpack.c.b16 %v122, %v121
    %155 = vmatpush.bf16.msra.mxu0 %v130
    %156 = vmatpush.bf16.msra.mxu0 %v129
    %157 = vmatpush.bf16.msra.mxu0 %v128
    %158 = vmatpush.bf16.msra.mxu0 %v127
    %159 = vmatpush.bf16.msra.mxu0 %v126
    %160 = vmatpush.bf16.msra.mxu0 %v125
    %161 = vmatpush.bf16.msra.mxu0 %v124
    %162 = vmatpush.bf16.msra.mxu0 %v123
    %163 = vmatmul.bf16.gmra.mxu0 %v55
    %v164 = vpop.f32.mrf.mxu0
    %v165 = vadd.f32 %v50, %v164
    %v166 = vpop.f32.mrf.mxu0
    %167 = vdwg.mxu0
    %168 = vmatpush.bf16.msra.mxu0 %v138
    %169 = vmatpush.bf16.msra.mxu0 %v137
    %170 = vmatpush.bf16.msra.mxu0 %v136
    %171 = vmatpush.bf16.msra.mxu0 %v135
    %172 = vmatpush.bf16.msra.mxu0 %v134
    %173 = vmatpush.bf16.msra.mxu0 %v133
    %174 = vmatpush.bf16.msra.mxu0 %v132
    %175 = vmatpush.bf16.msra.mxu0 %v131
    %176 = vmatmul.bf16.gmra.mxu0 %v56
    %v177 = vpop.f32.mrf.mxu0
    %v178 = vadd.f32 %v165, %v177
    %v179 = vpop.f32.mrf.mxu0
    %180 = vdwg.mxu0
    %181 = vst [vmem:[#allocation2] sm:$0xff] %v178
    // Predicated region
    $region14: #{_lambda_.1} parent=1 // pred_check
      _
    $region15: #{_lambda_.1} parent=1 // pred_check_branch
      %183 = sbr.rel (0) target = $region17
    $region16: #{_lambda_.1} parent=1 // pred_region
      %185 = vsyncadd [#allocation3], 0
      %s187 = sshll.u32 [#allocation2], 4
      %s188 = int_to_ptr.vmem [resolvable:$true] %s187
      %s189 = sshll.u32 %s3, 4
      %s190 = int_to_ptr.hbm [resolvable:$true] %s189
      %192 = dma.vmem_to_hbm [thread:$0]  %s188, 128, %s190, [#allocation3]
    $region17: #{_lambda_.1} parent=1 // pred_fallthru
      _
    // Predicated region
    $region18: #{_lambda_.1} parent=1 // pred_check
      _
    $region19: #{_lambda_.1} parent=1 // pred_check_branch
      %194 = sbr.rel (0) target = $region21
    $region20: #{_lambda_.1} parent=1 // pred_region
      %196 = dma.done [#allocation3], 128
    $region21: #{_lambda_.1} parent=1 // pred_fallthru
      _
    %197 = vsyncpa [#allocation3], 1

</llo_original>
